<compile_context>
chip_gen: v7x
topology: tpu7x:2x2x1
jax: 0.10.0
libtpu: 0.0.40
codegen_flags: <defaults>
</compile_context>

<pallas_src>
import jax
import jax.numpy as jnp
from jax.experimental import pallas as pl
from jax.experimental.pallas import tpu as pltpu


def _pos_embed_kernel(wpos_ref, o_ref):
    # wpos_ref: (block_s, D) tile of W_pos rows, VMEM-resident; re-fetched only
    #           when the seq-tile grid index changes (index_map is batch-invariant).
    # o_ref:    (block_b, block_s, D) output tile — one broadcasted store per step.
    o_ref[...] = jnp.broadcast_to(wpos_ref[...][None, :, :], o_ref.shape)


def _largest_divisor_tile(n, cap, align=1):
    """Largest t <= cap such that t divides n and t is a multiple of align, else None."""
    for cand in range(min(cap, n), 0, -1):
        if n % cand == 0 and cand % align == 0:
            return cand
    return None


def pos_embed_forward(tokens, W_pos, *, block_s_cap=512, block_b_cap=8):
    """tokens: [batch, seq] ints (only the shape is used).
    W_pos:  [n_ctx, d_model] float.
    Returns [batch, seq, d_model] with out[b] == W_pos[:seq]."""
    B, S = tokens.shape
    n_ctx, D = W_pos.shape
    assert S <= n_ctx, "sequence length exceeds n_ctx"

    # Wrapper-side slice: the kernel only ever needs the first S rows, and
    # slicing here makes a full-extent (S, D) block legal even when S % 8 != 0.
    wpos = W_pos[:S]

    # Seq tile: largest multiple-of-8 divisor of S up to the cap; otherwise use
    # the full (sliced) extent (always a legal block shape).
    block_s = _largest_divisor_tile(S, block_s_cap, align=8)
    if block_s is None:
        block_s = S
    # Batch tile: largest divisor of B up to the cap (leading dim, no alignment need).
    block_b = _largest_divisor_tile(B, block_b_cap, align=1) or B

    n_s = S // block_s
    n_b = B // block_b

    itemsize = jnp.dtype(W_pos.dtype).itemsize
    in_block_bytes = block_s * D * itemsize
    out_block_bytes = block_b * block_s * D * itemsize
    # Double-buffered input + output blocks, plus slack; bounded so the same
    # tiling fits v7x's 64 MiB physical VMEM as well as v5e/v6e's 128 MiB.
    vmem_limit = int(min(max(2 * (in_block_bytes + out_block_bytes) + (4 << 20),
                             16 << 20),
                         48 << 20))

    cost = pl.CostEstimate(
        flops=0,
        transcendentals=0,
        bytes_accessed=S * D * itemsize + B * S * D * itemsize,
    )

    return pl.pallas_call(
        _pos_embed_kernel,
        out_shape=jax.ShapeDtypeStruct((B, S, D), W_pos.dtype),
        grid_spec=pltpu.PrefetchScalarGridSpec(
            num_scalar_prefetch=0,
            # Seq-tile axis OUTER, batch-tile axis INNER: the W_pos block index
            # is batch-invariant, so each W_pos tile is fetched from HBM once
            # and stays in VMEM while it is broadcast-written n_b times.
            grid=(n_s, n_b),
            in_specs=[
                pl.BlockSpec((block_s, D), lambda s, b: (s, 0)),      # W_pos tile
            ],
            out_specs=pl.BlockSpec((block_b, block_s, D), lambda s, b: (b, s, 0)),
        ),
        compiler_params=pltpu.CompilerParams(
            dimension_semantics=("parallel", "parallel"),
            vmem_limit_bytes=vmem_limit,
        ),
        cost_estimate=cost,
    )(wpos)


def pos_embed_reference(tokens, W_pos):
    """Pure-JAX reference mirroring the PyTorch forward."""
    B, S = tokens.shape
    return jnp.broadcast_to(W_pos[:S][None, :, :], (B, S, W_pos.shape[1]))


if __name__ == "__main__":
    # Small config consistent with the module's shape conventions
    # (d_model kept lane-dense at 128 to exercise the unmasked-store path).
    batch, seq, d_model, n_ctx, d_vocab = 2, 8, 128, 64, 50
    init_range = 0.02

    key = jax.random.PRNGKey(0)
    k_tok, k_pos = jax.random.split(key)

    tokens = jax.random.randint(k_tok, (batch, seq), 0, d_vocab, dtype=jnp.int32)
    W_pos = init_range * jax.random.normal(k_pos, (n_ctx, d_model), dtype=jnp.float32)

    out = jax.block_until_ready(pos_embed_forward(tokens, W_pos))
    ref = pos_embed_reference(tokens, W_pos)
    assert out.shape == (batch, seq, d_model)
    assert jnp.array_equal(out, ref), "mismatch vs JAX reference"

    # Non-multiple-of-8 sequence length: exercises the full-extent fallback
    # that fixes the previous Mosaic (8,128)-divisibility hazard.
    tokens_odd = tokens[:, :5]
    out_odd = jax.block_until_ready(pos_embed_forward(tokens_odd, W_pos))
    assert jnp.array_equal(out_odd, pos_embed_reference(tokens_odd, W_pos)), \
        "mismatch vs JAX reference (odd seq length)"

    print("KERNEL_OK")
</pallas_src>

<mosaic_0001>
module attributes {stable_mosaic.version = 11 : i64} {
  func.func @_pos_embed_kernel(%arg0: i32, %arg1: i32, %arg2: memref<8x128xf32, #tpu.memory_space<vmem>>, %arg3: memref<2x8x128xf32, #tpu.memory_space<vmem>>) attributes {dimension_semantics = [#tpu.dimension_semantics<parallel>, #tpu.dimension_semantics<parallel>], iteration_bounds = array<i64: 1, 1>, scalar_prefetch = 0 : i64, scratch_operands = 0 : i64, tpu.core_type = #tpu.core_type<tc>, window_params = [{transform_indices = @transform_0, window_bounds = array<i64: 8, 128>}, {transform_indices = @transform_1, window_bounds = array<i64: 2, 8, 128>}]} {
    %c0 = arith.constant 0 : index
    %c0_0 = arith.constant 0 : index
    %0 = vector.load %arg2[%c0, %c0_0] : memref<8x128xf32, #tpu.memory_space<vmem>>, vector<8x128xf32>
    %1 = vector.shape_cast %0 : vector<8x128xf32> to vector<1x8x128xf32>
    %2 = vector.shape_cast %1 : vector<1x8x128xf32> to vector<1x8x128xf32>
    %3 = vector.broadcast %2 : vector<1x8x128xf32> to vector<2x8x128xf32>
    %c0_1 = arith.constant 0 : index
    %c0_2 = arith.constant 0 : index
    %c0_3 = arith.constant 0 : index
    %4 = vector.load %arg3[%c0_1, %c0_2, %c0_3] : memref<2x8x128xf32, #tpu.memory_space<vmem>>, vector<2x8x128xf32>
    tpu.vector_store %arg3[%c0_1, %c0_2, %c0_3], %3 {strides = array<i32>} : memref<2x8x128xf32, #tpu.memory_space<vmem>>, vector<2x8x128xf32>,
    return
  }
  func.func @transform_0(%arg0: i32, %arg1: i32) -> (i32, i32) {
    %c0_i32 = arith.constant 0 : i32
    %c0_i32_0 = arith.constant 0 : i32
    return %arg0, %c0_i32 : i32, i32
  }
  func.func @transform_1(%arg0: i32, %arg1: i32) -> (i32, i32, i32) {
    %c0_i32 = arith.constant 0 : i32
    %c0_i32_0 = arith.constant 0 : i32
    return %arg1, %arg0, %c0_i32 : i32, i32, i32
  }
}

</mosaic_0001>

<llo_original>
// kernel: tpu_custom_call.1
$region0: #{tpu_custom_call.1}
  #allocation0 [shape = 'u32[]', space=smem, size = 0x4, offset = 0x4, fixed_abs, tag = 'smem constant byte address 0x4 - core index']
  #allocation1 [shape = 'u32[144,128]{1,0:T(1,128)}', space=vmem, size = 0x12000, scoped, tag = 'internal scratch']
  %s0 = inlined_call_operand.hbm [shape: f32[8,128], index: 0, kind: input, shape index: {}]
  %s1 = inlined_call_operand.hbm [shape: f32[2,8,128], index: 1, kind: output, shape index: {}]
  %s2 = sld [smem:[#allocation0]]
  $region18: #{tpu_custom_call.1} parent=0
    _
  %s4 = ssub.s32 1, %s2
  %s5 = scalar_select 0, %s4, %s2
  $region1: #{tpu_custom_call.1} parent=0
    #allocation2 [shape = 'u8[4096]{0}', space=vmem, size = 0x1000, scoped, tag = 'input window, operand 0, single buffered']
    #allocation3 [shape = 's32[1]{0}', space=sflag, size = 0x4, scoped, tag = 'scoped memory for tpu_custom_call.1']
    #allocation4 [shape = 's32[1]{0}', space=sflag, size = 0x4, scoped, tag = 'scoped memory for tpu_custom_call.1']
    #allocation5 [shape = 'u8[8192]{0}', space=vmem, size = 0x2000, scoped, tag = 'output window, operand 0, single buffered']
    %6 = vsyncpa [#allocation3], 0
    %7 = vsyncpa [#allocation4], 0
    // Predicated region
    $region2: #{tpu_custom_call.1} parent=1 // pred_check
      _
    $region3: #{tpu_custom_call.1} parent=1 // pred_check_branch
      %9 = sbr.rel (0) target = $region5
    $region4: #{tpu_custom_call.1} parent=1 // pred_region
      %s11 = ssub.s32 128, 128
      %12 = vsyncadd [#allocation3], %s11
      %s14 = sshll.u32 [#allocation2], 4
      %s15 = int_to_ptr.vmem [resolvable:$true] %s14
      %17 = dma.hbm_to_vmem [thread:$0]  %s0, 128, %s15, [#allocation3]
    $region5: #{tpu_custom_call.1} parent=1 // pred_fallthru
      _
    // Predicated region
    $region6: #{tpu_custom_call.1} parent=1 // pred_check
      _
    $region7: #{tpu_custom_call.1} parent=1 // pred_check_branch
      %19 = sbr.rel (0) target = $region9
    $region8: #{tpu_custom_call.1} parent=1 // pred_region
      %20 = dma.done [#allocation3], 128
    $region9: #{tpu_custom_call.1} parent=1 // pred_fallthru
      _
    %v21 = vld [vmem:[#allocation2] sm:$0xff]
    %22 = vst [vmem:[#allocation5] sm:$0xff] %v21
    %23 = vst [vmem:[#allocation5 + $0x8] sm:$0xff] %v21
    // Predicated region
    $region10: #{tpu_custom_call.1} parent=1 // pred_check
      _
    $region11: #{tpu_custom_call.1} parent=1 // pred_check_branch
      %25 = sbr.rel (0) target = $region13
    $region12: #{tpu_custom_call.1} parent=1 // pred_region
      %s27 = ssub.s32 256, 256
      %28 = vsyncadd [#allocation4], %s27
      %s29 = sshll.u32 [#allocation5], 4
      %s30 = int_to_ptr.vmem [resolvable:$true] %s29
      %35 = dma.vmem_to_hbm [thread:$0]  %s30, 256, %s1, [#allocation4], 128, 128, 8
    $region13: #{tpu_custom_call.1} parent=1 // pred_fallthru
      _
    // Predicated region
    $region14: #{tpu_custom_call.1} parent=1 // pred_check
      _
    $region15: #{tpu_custom_call.1} parent=1 // pred_check_branch
      %37 = sbr.rel (0) target = $region17
    $region16: #{tpu_custom_call.1} parent=1 // pred_region
      %38 = dma.done [#allocation4], 256
    $region17: #{tpu_custom_call.1} parent=1 // pred_fallthru
      _
    %39 = vsyncpa [#allocation3], 1
    %40 = vsyncpa [#allocation4], 1

</llo_original>
